<compile_context>
chip_gen: v7x
topology: tpu7x:2x2x1
jax: 0.10.0
libtpu: 0.0.40
codegen_flags: <defaults>
</compile_context>

<pallas_src>
from functools import partial

import jax
import jax.numpy as jnp
from jax.experimental import pallas as pl
from jax.experimental.pallas import tpu as pltpu


# ---------------------------------------------------------------------------
# Kernel body
# ---------------------------------------------------------------------------
def _attn_kernel(q_ref, keys_ref, embeds_ref, out_ref, *, flat_out):
    # q_ref:      (1, Dq)        -- shared query row (resident across steps)
    # keys_ref:   (TB, S, Dq)    -- TB batch elements of keys
    # embeds_ref: (TB, S, De)    -- TB batch elements of embeds
    # out_ref:    (1, TB*De) if flat_out else (TB, De)
    q = q_ref[...]                                   # (1, Dq), native dtype
    k = keys_ref[...]                                # (TB, S, Dq)
    e = embeds_ref[...]                              # (TB, S, De)

    # scores[b, s] = sum_d q[0, d] * k[b, s, d]
    # VPU elementwise multiply + XLU lane reduce (no degenerate M=1 MXU
    # matmul), accumulated in f32.
    scores = jnp.sum((k * q).astype(jnp.float32), axis=-1)      # (TB, S)

    # Numerically stable softmax with deferred normalization.
    m = jnp.max(scores, axis=-1, keepdims=True)                 # (TB, 1)
    p = jnp.exp(scores - m)                                     # (TB, S)
    denom = jnp.sum(p, axis=-1, keepdims=True)                  # (TB, 1)

    # Unnormalized context (f32 accumulation via dtype promotion), then a
    # single per-row scale using the EUP approximate reciprocal (free slot).
    ctx = jnp.sum(p[:, :, None] * e, axis=1)                    # (TB, De), f32
    ctx = ctx * pl.reciprocal(denom, approx=True)               # (TB, De)

    if flat_out:
        # Lane-dense store: one (1, TB*De) row -> unmasked vst when TB*De is a
        # multiple of 128.
        tb, de = ctx.shape
        out_ref[...] = ctx.reshape(1, tb * de).astype(out_ref.dtype)
    else:
        out_ref[...] = ctx.astype(out_ref.dtype)


# ---------------------------------------------------------------------------
# VMEM / generation-aware sizing helpers
# ---------------------------------------------------------------------------
def _padded_bytes(shape, itemsize):
    """VMEM footprint of an array padded to (sublane, lane) tiles."""
    lane = 128
    sublane = 8 * max(1, 4 // itemsize)        # sub-32-bit packs along sublanes
    if len(shape) == 1:
        shape = (1,) + tuple(shape)
    *lead, s, l = shape
    rows = 1
    for d in lead:
        rows *= d
    return rows * (pl.cdiv(s, sublane) * sublane) * (pl.cdiv(l, lane) * lane) * itemsize


def _step_vmem_bytes(tb, S, Dq, De, in_itemsize, out_itemsize):
    """Per-grid-step VMEM estimate: double-buffered blocks + f32 temporaries."""
    k_blk = _padded_bytes((tb, S, Dq), in_itemsize)
    e_blk = _padded_bytes((tb, S, De), in_itemsize)
    q_blk = _padded_bytes((1, Dq), in_itemsize)
    o_blk = _padded_bytes((1, tb * De), out_itemsize)
    # f32 intermediates materialized by the body: (k*q) and p[:,:,None]*e.
    f32_tmp = _padded_bytes((tb, S, Dq), 4) + _padded_bytes((tb, S, De), 4)
    return 2 * (k_blk + e_blk + o_blk) + 2 * q_blk + f32_tmp


def _tpu_vmem_capacity_bytes():
    try:
        cap = int(pltpu.get_tpu_info().vmem_capacity_bytes)
        if cap > 0:
            return cap
    except Exception:
        pass
    return 64 << 20    # conservative default: v7x has the smallest per-TC VMEM


def _tpu_num_tensorcores(vmem_capacity):
    """How many TensorCores the 'parallel' grid axis is sharded across."""
    try:
        kind = jax.devices()[0].device_kind.lower()
    except Exception:
        kind = ""
    if "v7" in kind:
        return 2                    # v7x: 2 TensorCores per chip
    if "v4" in kind or "v5p" in kind:
        return 2                    # megacore generations
    if kind:
        return 1                    # v5e / v6e: single TensorCore
    # Unknown backend string: infer from VMEM size (v7x is 64 MiB per TC).
    return 2 if vmem_capacity <= (64 << 20) else 1


def _pick_batch_block(B, S, Dq, De, in_itemsize, out_itemsize, budget,
                      num_cores, max_tb=64):
    """Largest divisor of B whose per-step VMEM (blocks + temps) fits budget."""
    divisors = [d for d in range(1, B + 1) if B % d == 0]
    fits = [d for d in divisors
            if d <= max_tb
            and _step_vmem_bytes(d, S, Dq, De, in_itemsize, out_itemsize) <= budget]
    if not fits:
        # TODO(synk): flash-style S tiling (second "arbitrary" grid axis with a
        # running max / denominator) for sequences too long for a TB=1 block.
        raise ValueError(
            "Attn block for a single batch element "
            f"(S={S}, Dq={Dq}, De={De}) exceeds the VMEM budget ({budget} bytes); "
            "an S-tiled kernel variant is required.")
    if num_cores > 1:
        # Multi-TensorCore chip (v7x): the "parallel" grid axis is sharded
        # across cores -- prefer an even step count with >=2 steps per core so
        # both cores stay balanced and each per-core pipeline double-buffers.
        for pred in (
            lambda d: (B // d) % num_cores == 0 and (B // d) >= 2 * num_cores,
            lambda d: (B // d) % num_cores == 0,
            lambda d: (B // d) >= num_cores,
        ):
            pref = [d for d in fits if pred(d)]
            if pref:
                return max(pref)
        return max(fits)
    # Single TensorCore (v5e / v6e): largest fitting block wins.
    return max(fits)


# ---------------------------------------------------------------------------
# Public wrapper
# ---------------------------------------------------------------------------
def attn_forward(queries, embeds, keys, *, max_tb=64):
    """queries: (1, Dq), embeds: (B, S, De), keys: (B, S, Dq) -> (B, De)."""
    B, S, De = embeds.shape
    Bk, Sk, Dq = keys.shape
    assert (Bk, Sk) == (B, S), "embeds / keys batch and seq dims must match"
    assert queries.shape == (1, Dq), "queries must be (1, dim_query)"

    out_dtype = embeds.dtype
    in_itemsize = jnp.dtype(embeds.dtype).itemsize
    out_itemsize = jnp.dtype(out_dtype).itemsize

    vmem_cap = _tpu_vmem_capacity_bytes()
    num_cores = _tpu_num_tensorcores(vmem_cap)
    if vmem_cap <= (64 << 20):          # v7x: 64 MiB physical VMEM per TC
        budget, limit_cap = 26 << 20, 40 << 20
    else:                               # v5e / v6e: 128 MiB physical VMEM
        budget, limit_cap = 60 << 20, 96 << 20

    tb = _pick_batch_block(B, S, Dq, De, in_itemsize, out_itemsize,
                           budget, num_cores, max_tb=max_tb)
    grid = (B // tb,)

    step_bytes = _step_vmem_bytes(tb, S, Dq, De, in_itemsize, out_itemsize)
    vmem_limit = int(min(max(step_bytes + (2 << 20), 16 << 20), limit_cap))

    cost = pl.CostEstimate(
        flops=2 * B * S * (Dq + De),
        transcendentals=B * S + B,          # exp per score + reciprocal per row
        bytes_accessed=(B * S * (Dq + De) + Dq) * in_itemsize
        + B * De * out_itemsize,
    )

    # Lane-dense output store whenever the flattened row is a whole number of
    # 128-lane vectors; otherwise fall back to the plain (tb, De) block (the
    # output stream is tiny relative to the inputs, so this path is not on the
    # critical DMA path at small De).
    flat_out = (tb * De) % 128 == 0
    if flat_out:
        out_shape = jax.ShapeDtypeStruct((B // tb, tb * De), out_dtype)
        out_spec = pl.BlockSpec((1, tb * De), lambda b: (b, 0))
    else:
        out_shape = jax.ShapeDtypeStruct((B, De), out_dtype)
        out_spec = pl.BlockSpec((tb, De), lambda b: (b, 0))

    out = pl.pallas_call(
        partial(_attn_kernel, flat_out=flat_out),
        out_shape=out_shape,
        grid_spec=pltpu.PrefetchScalarGridSpec(
            num_scalar_prefetch=0,
            grid=grid,
            in_specs=[
                pl.BlockSpec((1, Dq), lambda b: (0, 0)),          # shared query
                pl.BlockSpec((tb, S, Dq), lambda b: (b, 0, 0)),   # keys block
                pl.BlockSpec((tb, S, De), lambda b: (b, 0, 0)),   # embeds block
            ],
            out_specs=out_spec,
        ),
        compiler_params=pltpu.CompilerParams(
            dimension_semantics=("parallel",),
            vmem_limit_bytes=vmem_limit,
        ),
        cost_estimate=cost,
    )(queries, keys, embeds)

    # Free layout plumbing back to the module's (B, De) output.
    return out.reshape(B, De)


def reference_forward(queries, embeds, keys):
    # Pure-JAX reference matching the PyTorch semantics exactly.
    scores = jnp.einsum("qd,bsd->bqs", queries, keys)           # (B, 1, S)
    w = jax.nn.softmax(scores, axis=2)                          # softmax over S
    ctx = jnp.einsum("bqs,bse->bqe", w, embeds)                 # (B, 1, De)
    return jnp.squeeze(ctx, axis=1)                             # (B, De)


if __name__ == "__main__":
    # Small shapes consistent with the module's forward.
    B, S = 2, 8
    Dq = 32   # dim_query (keys feature dim)
    De = 32   # embeds feature dim
    query_var = 0.5

    key = jax.random.PRNGKey(0)
    kq, ke, kk = jax.random.split(key, 3)

    # torch.randn(1, dim_query).normal_(0, query_var) equivalent (host-side init).
    queries = query_var * jax.random.normal(kq, (1, Dq), dtype=jnp.float32)
    embeds = jax.random.normal(ke, (B, S, De), dtype=jnp.float32)
    keys = jax.random.normal(kk, (B, S, Dq), dtype=jnp.float32)

    out = attn_forward(queries, embeds, keys)
    out = jax.block_until_ready(out)

    ref = reference_forward(queries, embeds, keys)
    assert out.shape == (B, De)
    # Tolerance absorbs the EUP approximate reciprocal in the softmax denom.
    assert jnp.allclose(out, ref, atol=1e-2, rtol=1e-2), "mismatch vs reference"

    print("KERNEL_OK")
</pallas_src>

<mosaic_0001>
module attributes {stable_mosaic.version = 11 : i64} {
  func.func @_attn_kernel(%arg0: i32, %arg1: memref<1x32xf32, #tpu.memory_space<vmem>>, %arg2: memref<2x8x32xf32, #tpu.memory_space<vmem>>, %arg3: memref<2x8x32xf32, #tpu.memory_space<vmem>>, %arg4: memref<2x32xf32, #tpu.memory_space<vmem>>) attributes {dimension_semantics = [#tpu.dimension_semantics<parallel>], iteration_bounds = array<i64: 1>, scalar_prefetch = 0 : i64, scratch_operands = 0 : i64, tpu.core_type = #tpu.core_type<tc>, window_params = [{pipeline_mode = #tpu.pipeline_mode<synchronous>, transform_indices = @transform_0, window_bounds = array<i64: 1, 32>}, {transform_indices = @transform_1, window_bounds = array<i64: 2, 8, 32>}, {transform_indices = @transform_2, window_bounds = array<i64: 2, 8, 32>}, {transform_indices = @transform_3, window_bounds = array<i64: 2, 32>}]} {
    %c0 = arith.constant 0 : index
    %c0_0 = arith.constant 0 : index
    %0 = vector.load %arg1[%c0, %c0_0] : memref<1x32xf32, #tpu.memory_space<vmem>>, vector<1x32xf32>
    %c0_1 = arith.constant 0 : index
    %c0_2 = arith.constant 0 : index
    %c0_3 = arith.constant 0 : index
    %1 = vector.load %arg2[%c0_1, %c0_2, %c0_3] : memref<2x8x32xf32, #tpu.memory_space<vmem>>, vector<2x8x32xf32>
    %c0_4 = arith.constant 0 : index
    %c0_5 = arith.constant 0 : index
    %c0_6 = arith.constant 0 : index
    %2 = vector.load %arg3[%c0_4, %c0_5, %c0_6] : memref<2x8x32xf32, #tpu.memory_space<vmem>>, vector<2x8x32xf32>
    %3 = vector.shape_cast %0 : vector<1x32xf32> to vector<1x1x32xf32>
    %4 = vector.broadcast %3 : vector<1x1x32xf32> to vector<2x8x32xf32>
    %5 = arith.mulf %1, %4 : vector<2x8x32xf32>
    %cst = arith.constant dense<0.000000e+00> : vector<2x8xf32>
    %6 = vector.multi_reduction <add>, %5, %cst [2] : vector<2x8x32xf32> to vector<2x8xf32>
    %cst_7 = arith.constant dense<0xFF800000> : vector<2xf32>
    %7 = vector.multi_reduction <maximumf>, %6, %cst_7 [1] : vector<2x8xf32> to vector<2xf32>
    %8 = vector.shape_cast %7 : vector<2xf32> to vector<2x1xf32>
    %9 = vector.broadcast %8 : vector<2x1xf32> to vector<2x8xf32>
    %10 = arith.subf %6, %9 : vector<2x8xf32>
    %11 = math.exp %10 : vector<2x8xf32>
    %cst_8 = arith.constant dense<0.000000e+00> : vector<2xf32>
    %12 = vector.multi_reduction <add>, %11, %cst_8 [1] : vector<2x8xf32> to vector<2xf32>
    %13 = vector.shape_cast %12 : vector<2xf32> to vector<2x1xf32>
    %14 = vector.shape_cast %11 : vector<2x8xf32> to vector<2x8x1xf32>
    %15 = vector.broadcast %14 : vector<2x8x1xf32> to vector<2x8x32xf32>
    %16 = arith.mulf %15, %2 : vector<2x8x32xf32>
    %cst_9 = arith.constant dense<0.000000e+00> : vector<2x32xf32>
    %17 = vector.multi_reduction <add>, %16, %cst_9 [1] : vector<2x8x32xf32> to vector<2x32xf32>
    %18 = tpu.reciprocal %13 {approx = true} : vector<2x1xf32> -> vector<2x1xf32>
    %19 = vector.broadcast %18 : vector<2x1xf32> to vector<2x32xf32>
    %20 = arith.mulf %17, %19 : vector<2x32xf32>
    %c0_10 = arith.constant 0 : index
    %c0_11 = arith.constant 0 : index
    %21 = vector.load %arg4[%c0_10, %c0_11] : memref<2x32xf32, #tpu.memory_space<vmem>>, vector<2x32xf32>
    tpu.vector_store %arg4[%c0_10, %c0_11], %20 {strides = array<i32>} : memref<2x32xf32, #tpu.memory_space<vmem>>, vector<2x32xf32>,
    return
  }
  func.func @transform_0(%arg0: i32) -> (i32, i32) {
    %c0_i32 = arith.constant 0 : i32
    %c0_i32_0 = arith.constant 0 : i32
    %c0_i32_1 = arith.constant 0 : i32
    return %c0_i32, %c0_i32_0 : i32, i32
  }
  func.func @transform_1(%arg0: i32) -> (i32, i32, i32) {
    %c0_i32 = arith.constant 0 : i32
    %c0_i32_0 = arith.constant 0 : i32
    %c0_i32_1 = arith.constant 0 : i32
    return %arg0, %c0_i32, %c0_i32_0 : i32, i32, i32
  }
  func.func @transform_2(%arg0: i32) -> (i32, i32, i32) {
    %c0_i32 = arith.constant 0 : i32
    %c0_i32_0 = arith.constant 0 : i32
    %c0_i32_1 = arith.constant 0 : i32
    return %arg0, %c0_i32, %c0_i32_0 : i32, i32, i32
  }
  func.func @transform_3(%arg0: i32) -> (i32, i32) {
    %c0_i32 = arith.constant 0 : i32
    %c0_i32_0 = arith.constant 0 : i32
    return %arg0, %c0_i32 : i32, i32
  }
}

</mosaic_0001>

<llo_original>
// kernel: tpu_custom_call.1
$region0: #{tpu_custom_call.1}
  #allocation0 [shape = 'u32[]', space=smem, size = 0x4, offset = 0x4, fixed_abs, tag = 'smem constant byte address 0x4 - core index']
  #allocation1 [shape = 'u32[144,128]{1,0:T(1,128)}', space=vmem, size = 0x12000, scoped, tag = 'internal scratch']
  %s0 = inlined_call_operand.hbm [shape: f32[1,32], index: 0, kind: input, shape index: {}]
  %s1 = inlined_call_operand.hbm [shape: f32[2,8,32], index: 1, kind: input, shape index: {}]
  %s2 = inlined_call_operand.hbm [shape: f32[2,8,32], index: 2, kind: input, shape index: {}]
  %s3 = inlined_call_operand.hbm [shape: f32[2,32], index: 3, kind: output, shape index: {}]
  %s4 = sld [smem:[#allocation0]]
  $region34: #{tpu_custom_call.1} parent=0
    _
  %s6 = ssub.s32 1, %s4
  %s7 = scalar_select 0, %s6, %s4
  $region1: #{tpu_custom_call.1} parent=0
    #allocation2 [shape = 'u8[512]{0}', space=vmem, size = 0x400, scoped, tag = 'input window, operand 0, single buffered']
    #allocation3 [shape = 's32[1]{0}', space=sflag, size = 0x4, scoped, tag = 'scoped memory for tpu_custom_call.1']
    #allocation4 [shape = 's32[1]{0}', space=sflag, size = 0x4, scoped, tag = 'scoped memory for tpu_custom_call.1']
    #allocation5 [shape = 'u8[8192]{0}', space=vmem, size = 0x2000, scoped, tag = 'input window, operand 1, single buffered']
    #allocation6 [shape = 's32[1]{0}', space=sflag, size = 0x4, scoped, tag = 'scoped memory for tpu_custom_call.1']
    #allocation7 [shape = 'u8[8192]{0}', space=vmem, size = 0x2000, scoped, tag = 'input window, operand 2, single buffered']
    #allocation8 [shape = 'u8[1024]{0}', space=vmem, size = 0x400, scoped, tag = 'output window, operand 0, single buffered']
    %8 = vsyncpa [#allocation3], 0
    %9 = vsyncpa [#allocation6], 0
    %10 = vsyncpa [#allocation4], 0
    // Predicated region
    $region2: #{tpu_custom_call.1} parent=1 // pred_check
      _
    $region3: #{tpu_custom_call.1} parent=1 // pred_check_branch
      %12 = sbr.rel (0) target = $region5
    $region4: #{tpu_custom_call.1} parent=1 // pred_region
      %s14 = ssub.s32 16, 16
      %15 = vsyncadd [#allocation3], %s14
      %s17 = sshll.u32 [#allocation2], 4
      %s18 = int_to_ptr.vmem [resolvable:$true] %s17
      %20 = dma.hbm_to_vmem [thread:$0]  %s0, 16, %s18, [#allocation3]
    $region5: #{tpu_custom_call.1} parent=1 // pred_fallthru
      _
    // Predicated region
    $region6: #{tpu_custom_call.1} parent=1 // pred_check
      _
    $region7: #{tpu_custom_call.1} parent=1 // pred_check_branch
      %22 = sbr.rel (0) target = $region9
    $region8: #{tpu_custom_call.1} parent=1 // pred_region
      %s24 = ssub.s32 256, 256
      %25 = vsyncadd [#allocation6], %s24
      %s26 = sshll.u32 [#allocation5], 4
      %s27 = int_to_ptr.vmem [resolvable:$true] %s26
      %32 = dma.hbm_to_vmem [thread:$0]  %s1, 256, %s27, [#allocation6], 128, 128, 8
    $region9: #{tpu_custom_call.1} parent=1 // pred_fallthru
      _
    // Predicated region
    $region10: #{tpu_custom_call.1} parent=1 // pred_check
      _
    $region11: #{tpu_custom_call.1} parent=1 // pred_check_branch
      %34 = sbr.rel (0) target = $region13
    $region12: #{tpu_custom_call.1} parent=1 // pred_region
      %s36 = ssub.s32 256, 256
      %37 = vsyncadd [#allocation6], %s36
      %s38 = sshll.u32 [#allocation7], 4
      %s39 = int_to_ptr.vmem [resolvable:$true] %s38
      %44 = dma.hbm_to_vmem [thread:$0]  %s2, 256, %s39, [#allocation6], 128, 128, 8
    $region13: #{tpu_custom_call.1} parent=1 // pred_fallthru
      _
    // Predicated region
    $region14: #{tpu_custom_call.1} parent=1 // pred_check
      _
    $region15: #{tpu_custom_call.1} parent=1 // pred_check_branch
      %46 = sbr.rel (0) target = $region17
    $region16: #{tpu_custom_call.1} parent=1 // pred_region
      %47 = dma.done [#allocation3], 16
    $region17: #{tpu_custom_call.1} parent=1 // pred_fallthru
      _
    // Predicated region
    $region18: #{tpu_custom_call.1} parent=1 // pred_check
      _
    $region19: #{tpu_custom_call.1} parent=1 // pred_check_branch
      %49 = sbr.rel (0) target = $region21
    $region20: #{tpu_custom_call.1} parent=1 // pred_region
      %50 = dma.done [#allocation6], 256
    $region21: #{tpu_custom_call.1} parent=1 // pred_fallthru
      _
    // Predicated region
    $region22: #{tpu_custom_call.1} parent=1 // pred_check
      _
    $region23: #{tpu_custom_call.1} parent=1 // pred_check_branch
      %52 = sbr.rel (0) target = $region25
    $region24: #{tpu_custom_call.1} parent=1 // pred_region
      %53 = dma.done [#allocation6], 256
    $region25: #{tpu_custom_call.1} parent=1 // pred_fallthru
      _
    %v54 = vld [vmem:[#allocation2] sm:$0x1]
    %v55 = vld [vmem:[#allocation5] sm:$0xff]
    %v56 = vld [vmem:[#allocation5 + $0x8] sm:$0xff]
    %v57 = vld [vmem:[#allocation7] sm:$0xff]
    %v58 = vld [vmem:[#allocation7 + $0x8] sm:$0xff]
    %v60 = vlaneseq
    %v61 = vshrl.u32 %v60, 7
    %v62 = vsub.s32 0, %v61
    %v63 = vrot.slane %v54, %v62
    %v65 = vmul.f32 %v55, %v63
    %v66 = vmul.f32 %v56, %v63
    %vm67 = vcmask 261120
    %v68 = vsel %vm67, %v65, 0.0
    %69 = vadd.xlane.f32.xlu0 %v68
    %v70 = vpop.xlane.xlu0 %69
    %v71 = vsel %vm67, %v66, 0.0
    %72 = vadd.xlane.f32.xlu0 %v71
    %v73 = vpop.xlane.xlu0 %72
    %v76 = vlaneseq
    %v77 = vand.u32 %v76, 127
    %v78 = vlaneseq
    %v79 = vshrl.u32 %v78, 7
    %v80 = vsub.s32 %v77, %v79
    %v81 = vrot.slane %v70, %v80
    %v82 = vlaneseq
    %v83 = vshrl.u32 %v82, 7
    %v84 = vsub.s32 %v77, %v83
    %v85 = vrot.slane %v73, %v84
    %vm86 = vcmask 1041409
    %v87 = vsel %vm86, %v85, %v81
    %vm89 = vcmask 58368
    %v90 = vsel %vm89, %v87, -inf
    %91 = vmax.xlane.f32.xlu0 %v90
    %v92 = vpop.xlane.xlu0 %91
    %v94 = vlaneseq
    %v95 = vshrl.u32 %v94, 7
    %v96 = vsub.s32 0, %v95
    %v97 = vrot.slane %v92, %v96
    %v98 = vlaneseq
    %v99 = vshrl.u32 %v98, 7
    %v100 = vsub.s32 1, %v99
    %v101 = vrot.slane %v92, %v100
    %v104 = vsub.f32 %v70, %v97
    %v105 = vsub.f32 %v73, %v101
    %v106 = vmul.f32 %v104, 1.442695
    %v107 = vpow.pop %v106
    %v108 = vmul.f32 %v105, 1.442695
    %v109 = vpow.pop %v108
    %112 = vset.pattern.permute.xlu0 0
    %113 = vperm.xlu0 %112, %v107
    %v114 = vpop.permute.xlu0 %113
    %115 = vset.pattern.permute.xlu0 0
    %116 = vperm.xlu0 %115, %v109
    %v117 = vpop.permute.xlu0 %116
    %v118 = vlaneseq
    %v119 = vshrl.u32 %v118, 7
    %v120 = vsub.s32 %v77, %v119
    %v121 = vrot.slane %v114, %v120
    %v122 = vlaneseq
    %v123 = vshrl.u32 %v122, 7
    %v124 = vsub.s32 %v77, %v123
    %v125 = vrot.slane %v117, %v124
    %v126 = vsel %vm86, %v125, %v121
    %v128 = vsel %vm89, %v126, 0.0
    %129 = vadd.xlane.f32.xlu0 %v128
    %v130 = vpop.xlane.xlu0 %129
    %v133 = vmul.f32 %v114, %v57
    %v134 = vmul.f32 %v117, %v58
    %v135 = vsel %vm67, %v133, 0.0
    %v136 = vrot.slane %v135, 4
    %v137 = vadd.f32 %v135, %v136
    %v138 = vrot.slane %v137, 2
    %v139 = vadd.f32 %v137, %v138
    %v140 = vrot.slane %v139, 1
    %v141 = vadd.f32 %v139, %v140
    %v142 = vsel %vm67, %v134, 0.0
    %v143 = vrot.slane %v142, 4
    %v144 = vadd.f32 %v142, %v143
    %v145 = vrot.slane %v144, 2
    %v146 = vadd.f32 %v144, %v145
    %v147 = vrot.slane %v146, 1
    %v148 = vadd.f32 %v146, %v147
    %v149 = vrcp.pop %v130
    %v151 = vrot.slane %v149, 1
    %v154 = vmul.f32 %v141, %v149
    %v155 = vmul.f32 %v148, %v151
    %v158 = vrot.slane %v155, 7
    %v159 = vsel %vm86, %v158, %v154
    %vm161 = vcmask 254976
    %162 = vst.msk [vmem:[#allocation8] sm:$0x3] %vm161, %v159
    // Predicated region
    $region26: #{tpu_custom_call.1} parent=1 // pred_check
      _
    $region27: #{tpu_custom_call.1} parent=1 // pred_check_branch
      %164 = sbr.rel (0) target = $region29
    $region28: #{tpu_custom_call.1} parent=1 // pred_region
      %s166 = ssub.s32 32, 32
      %167 = vsyncadd [#allocation4], %s166
      %s169 = sshll.u32 [#allocation8], 4
      %s170 = int_to_ptr.vmem [resolvable:$true] %s169
      %172 = dma.vmem_to_hbm [thread:$0]  %s170, 32, %s3, [#allocation4]
    $region29: #{tpu_custom_call.1} parent=1 // pred_fallthru
      _
    // Predicated region
    $region30: #{tpu_custom_call.1} parent=1 // pred_check
      _
    $region31: #{tpu_custom_call.1} parent=1 // pred_check_branch
      %174 = sbr.rel (0) target = $region33
    $region32: #{tpu_custom_call.1} parent=1 // pred_region
      %175 = dma.done [#allocation4], 32
    $region33: #{tpu_custom_call.1} parent=1 // pred_fallthru
      _
    %176 = vsyncpa [#allocation3], 1
    %177 = vsyncpa [#allocation6], 1
    %178 = vsyncpa [#allocation4], 1

</llo_original>
